<compile_context>
chip_gen: v7x
topology: tpu7x:2x2x1
jax: 0.10.0
libtpu: 0.0.40
codegen_flags: <defaults>
</compile_context>

<pallas_src>
import numpy as np
import jax
import jax.numpy as jnp
from jax import lax
from jax.experimental import pallas as pl
from jax.experimental.pallas import tpu as pltpu

LANE = 128


def _round_up(x, m):
    return -(-x // m) * m


def _tensorcores_per_device():
    # v7x exposes 2 TensorCores per device to a single Pallas grid ("parallel"
    # axes are sharded across them).  v5e/v6e have one TC: a second partial
    # output block there is pure overhead, so gate on the chip kind.
    try:
        kind = jax.devices()[0].device_kind.lower()
    except Exception:
        return 1
    return 2 if "v7" in kind else 1


@jax.jit
def yolo_loss(predictions, target, anchors):
    """predictions (B, A, S, S, 5+C), target (B, A, S, S, 6), anchors (A, 2)."""
    B, A, S, _, D = predictions.shape
    C = D - 5
    M = B * S * S                                   # cells per anchor

    rows = -(-M // LANE)                            # sublane rows per channel
    # Adaptive tile: minimise tail padding; tie-break to the larger tile
    # (fewer ~0.35us per-step pipeline overheads).
    rows_tile = min((8, 16, 32),
                    key=lambda rt: (_round_up(rows, rt) - rows, -rt))
    n_tiles = -(-rows // rows_tile)

    P = 2 if (_tensorcores_per_device() >= 2 and n_tiles >= 2) else 1
    if P == 2 and n_tiles % 2:
        n_tiles += 1                                # extra tile is fully masked
    tiles_per_p = n_tiles // P
    rows_padded = n_tiles * rows_tile
    m_padded = rows_padded * LANE

    # ---- relayout: channel-major, cell index dense on (sublane, lane) ------
    pred_t = jnp.transpose(predictions.astype(jnp.float32),
                           (1, 4, 0, 2, 3)).reshape(A, D, M)
    tgt_t = jnp.transpose(target.astype(jnp.float32),
                          (1, 4, 0, 2, 3)).reshape(A, 6, M)
    if m_padded != M:
        pad = ((0, 0), (0, 0), (0, m_padded - M))
        pred_t = jnp.pad(pred_t, pad)
        tgt_t = jnp.pad(tgt_t, pad)
    pred_t = pred_t.reshape(A, D, rows_padded, LANE)
    tgt_t = tgt_t.reshape(A, 6, rows_padded, LANE)

    anc_flat = anchors.reshape(-1).astype(jnp.float32)        # (A*2,) -> SMEM

    def kernel(anc_ref, pred_ref, tgt_ref, out_ref):
        # pred_ref: (D, rows_tile, LANE), tgt_ref: (6, rows_tile, LANE)
        # out_ref:  (4, rows_tile, LANE) accumulator, resident per p
        p_id = pl.program_id(0)
        a_id = pl.program_id(1)
        t_id = pl.program_id(2)

        @pl.when(jnp.logical_and(a_id == 0, t_id == 0))
        def _init():
            out_ref[...] = jnp.zeros_like(out_ref)

        aw = anc_ref[2 * a_id]            # scalar anchor width  (SMEM read)
        ah = anc_ref[2 * a_id + 1]        # scalar anchor height (SMEM read)

        # ---- validity mask for the (possibly padded) tail -----------------
        tile_idx = p_id * tiles_per_p + t_id
        r_iota = lax.broadcasted_iota(jnp.int32, (rows_tile, LANE), 0)
        l_iota = lax.broadcasted_iota(jnp.int32, (rows_tile, LANE), 1)
        cell = (tile_idx * rows_tile + r_iota) * LANE + l_iota
        valid = cell < M

        t_obj = tgt_ref[0]
        # padded cells have t_obj == 0, so they can never be "obj"
        obj = jnp.where(t_obj == 1.0, 1.0, 0.0)
        noobj = jnp.where(jnp.logical_and(t_obj == 0.0, valid), 1.0, 0.0)

        # ---- no-object loss: BCEWithLogits on objectness ------------------
        p_obj = pred_ref[0]
        e0 = jnp.exp(-jnp.abs(p_obj))
        # (1 + e0) is in [1, 2], so plain log is numerically fine here.
        bce = jnp.maximum(p_obj, 0.0) - p_obj * t_obj + jnp.log(1.0 + e0)
        sig_p0 = jnp.where(p_obj >= 0.0, 1.0, e0) / (1.0 + e0)   # exact

        # ---- decoded boxes + IoU (midpoint format) ------------------------
        # sigmoid via tanh: one EUP op per channel instead of exp + recip.
        sx = 0.5 * (jnp.tanh(0.5 * pred_ref[1]) + 1.0)
        sy = 0.5 * (jnp.tanh(0.5 * pred_ref[2]) + 1.0)
        raw_w = pred_ref[3]
        raw_h = pred_ref[4]
        pw = jnp.exp(raw_w) * aw
        ph = jnp.exp(raw_h) * ah
        t_x, t_y, t_w, t_h = tgt_ref[1], tgt_ref[2], tgt_ref[3], tgt_ref[4]

        iw = jnp.maximum(jnp.minimum(sx + pw * 0.5, t_x + t_w * 0.5)
                         - jnp.maximum(sx - pw * 0.5, t_x - t_w * 0.5), 0.0)
        ih = jnp.maximum(jnp.minimum(sy + ph * 0.5, t_y + t_h * 0.5)
                         - jnp.maximum(sy - ph * 0.5, t_y - t_h * 0.5), 0.0)
        inter = iw * ih
        union = jnp.abs(pw * ph) + jnp.abs(t_w * t_h) - inter + 1e-6
        iou = inter / union                          # exact (torch parity)
        obj_sq = (sig_p0 - iou * t_obj) ** 2

        # ---- box-coordinate loss ------------------------------------------
        tw_log = jnp.log(1e-16 + t_w * (1.0 / aw))
        th_log = jnp.log(1e-16 + t_h * (1.0 / ah))
        box_sq = ((sx - t_x) ** 2 + (sy - t_y) ** 2
                  + (raw_w - tw_log) ** 2 + (raw_h - th_log) ** 2)

        # ---- class loss: cross-entropy over C class channels ---------------
        # fori_loop keeps the live vreg set bounded (no unrolled spill chain).
        cls_idx = tgt_ref[5].astype(jnp.int32)

        def max_body(c, m):
            return jnp.maximum(m, pred_ref[5 + c])

        mval = lax.fori_loop(1, C, max_body, pred_ref[5], unroll=True)

        def ce_body(c, carry):
            se, tl = carry
            lc = pred_ref[5 + c]
            se = se + jnp.exp(lc - mval)
            tl = tl + jnp.where(cls_idx == c, lc, 0.0)
            return se, tl

        zero = jnp.zeros((rows_tile, LANE), jnp.float32)
        sum_exp, true_logit = lax.fori_loop(0, C, ce_body, (zero, zero),
                                            unroll=True)
        cls_ls = mval + jnp.log(sum_exp) - true_logit

        # ---- dense accumulation; reduced once in the wrapper ---------------
        out_ref[0] += bce * noobj          # no-object BCE sum
        out_ref[1] += obj_sq * obj         # object MSE sum
        out_ref[2] += box_sq * obj         # box-coordinate squared-err sum
        out_ref[3] += cls_ls * obj         # class CE sum

    out = pl.pallas_call(
        kernel,
        out_shape=jax.ShapeDtypeStruct((P, 4, rows_tile, LANE), jnp.float32),
        grid_spec=pltpu.PrefetchScalarGridSpec(
            num_scalar_prefetch=0,
            grid=(P, A, tiles_per_p),
            in_specs=[
                pl.BlockSpec(memory_space=pltpu.MemorySpace.SMEM),   # anchors
                pl.BlockSpec((pl.Squeezed(), D, rows_tile, LANE),
                             lambda p, a, t: (a, 0, p * tiles_per_p + t, 0)),
                pl.BlockSpec((pl.Squeezed(), 6, rows_tile, LANE),
                             lambda p, a, t: (a, 0, p * tiles_per_p + t, 0)),
            ],
            out_specs=pl.BlockSpec((pl.Squeezed(), 4, rows_tile, LANE),
                                   lambda p, a, t: (p, 0, 0, 0)),
        ),
        compiler_params=pltpu.CompilerParams(
            dimension_semantics=("parallel", "arbitrary", "arbitrary")),
    )(anc_flat, pred_t, tgt_t)

    s = jnp.sum(out, axis=(0, 2, 3))           # (4,) partial sums
    noobj_sum, obj_sq_sum, box_sq_sum, cls_sum = s[0], s[1], s[2], s[3]

    # counts done on the (small) objectness channel in the wrapper
    t_obj_full = target[..., 0].astype(jnp.float32)
    obj_cnt = jnp.sum(jnp.where(t_obj_full == 1.0, 1.0, 0.0))
    noobj_cnt = jnp.sum(jnp.where(t_obj_full == 0.0, 1.0, 0.0))

    # NOTE: obj_cnt == 0 yields NaN, matching torch's mean over an empty mask.
    no_object_loss = noobj_sum / noobj_cnt
    object_loss = obj_sq_sum / obj_cnt
    box_loss = box_sq_sum / (4.0 * obj_cnt)
    class_loss = cls_sum / obj_cnt
    return no_object_loss * 10.0 + object_loss + box_loss * 10.0 + class_loss


def _reference(pred, tgt, anchors):
    """Pure-numpy re-implementation of the PyTorch forward (for verification)."""
    pred = pred.astype(np.float64).copy()
    tgt = tgt.astype(np.float64).copy()
    anc = anchors.astype(np.float64).reshape(1, 3, 1, 1, 2)
    obj = tgt[..., 0] == 1
    noobj = tgt[..., 0] == 0
    sig = lambda x: 1.0 / (1.0 + np.exp(-x))

    x = pred[..., 0:1][noobj]
    y = tgt[..., 0:1][noobj]
    no_object_loss = np.mean(np.maximum(x, 0) - x * y + np.log1p(np.exp(-np.abs(x))))

    box_preds = np.concatenate([sig(pred[..., 1:3]), np.exp(pred[..., 3:5]) * anc], axis=-1)
    bp = box_preds[obj]
    tb = tgt[..., 1:5][obj]
    b1x1 = bp[:, 0] - bp[:, 2] / 2; b1x2 = bp[:, 0] + bp[:, 2] / 2
    b1y1 = bp[:, 1] - bp[:, 3] / 2; b1y2 = bp[:, 1] + bp[:, 3] / 2
    b2x1 = tb[:, 0] - tb[:, 2] / 2; b2x2 = tb[:, 0] + tb[:, 2] / 2
    b2y1 = tb[:, 1] - tb[:, 3] / 2; b2y2 = tb[:, 1] + tb[:, 3] / 2
    inter = (np.clip(np.minimum(b1x2, b2x2) - np.maximum(b1x1, b2x1), 0, None)
             * np.clip(np.minimum(b1y2, b2y2) - np.maximum(b1y1, b2y1), 0, None))
    a1 = np.abs(bp[:, 2] * bp[:, 3])
    a2 = np.abs(tb[:, 2] * tb[:, 3])
    iou = inter / (a1 + a2 - inter + 1e-6)
    object_loss = np.mean((sig(pred[..., 0:1][obj])[:, 0] - iou * tgt[..., 0:1][obj][:, 0]) ** 2)

    pred[..., 1:3] = sig(pred[..., 1:3])
    tgt[..., 3:5] = np.log(1e-16 + tgt[..., 3:5] / anc)
    box_loss = np.mean((pred[..., 1:5][obj] - tgt[..., 1:5][obj]) ** 2)

    logits = pred[..., 5:][obj]
    labels = tgt[..., 5][obj].astype(np.int64)
    m = logits.max(axis=-1, keepdims=True)
    lse = (m + np.log(np.exp(logits - m).sum(-1, keepdims=True)))[:, 0]
    true_logit = logits[np.arange(len(labels)), labels]
    class_loss = np.mean(lse - true_logit)

    return no_object_loss * 10 + object_loss + box_loss * 10 + class_loss


if __name__ == "__main__":
    key = jax.random.PRNGKey(0)
    B, A, S, C = 2, 3, 8, 7
    D = 5 + C
    k1, k2, k3, k4, k5 = jax.random.split(key, 5)

    predictions = jax.random.normal(k1, (B, A, S, S, D), dtype=jnp.float32)
    t_obj = (jax.random.uniform(k2, (B, A, S, S)) < 0.3).astype(jnp.float32)
    t_xy = jax.random.uniform(k3, (B, A, S, S, 2), minval=0.0, maxval=1.0)
    t_wh = jax.random.uniform(k4, (B, A, S, S, 2), minval=0.1, maxval=2.0)
    t_cls = jax.random.randint(k5, (B, A, S, S), 0, C).astype(jnp.float32)
    target = jnp.concatenate(
        [t_obj[..., None], t_xy, t_wh, t_cls[..., None]], axis=-1
    ).astype(jnp.float32)
    anchors = jnp.array([[1.0, 1.0], [2.0, 1.5], [0.5, 0.8]], dtype=jnp.float32)

    loss = yolo_loss(predictions, target, anchors)
    loss = jax.block_until_ready(loss)

    ref = _reference(np.asarray(predictions), np.asarray(target), np.asarray(anchors))
    assert np.isfinite(float(loss))
    # exact division in-kernel -> tighter tolerance than the approx-recip version
    np.testing.assert_allclose(float(loss), ref, rtol=1e-3, atol=1e-3)
    print("KERNEL_OK")
</pallas_src>

<mosaic_0001>
module attributes {stable_mosaic.version = 11 : i64} {
  func.func @kernel(%arg0: i32, %arg1: i32, %arg2: i32, %arg3: memref<6xf32, #tpu.memory_space<smem>>, %arg4: memref<1x12x8x128xf32, #tpu.memory_space<vmem>>, %arg5: memref<1x6x8x128xf32, #tpu.memory_space<vmem>>, %arg6: memref<1x4x8x128xf32, #tpu.memory_space<vmem>>) attributes {dimension_semantics = [#tpu.dimension_semantics<parallel>, #tpu.dimension_semantics<arbitrary>, #tpu.dimension_semantics<arbitrary>], iteration_bounds = array<i64: 1, 3, 1>, scalar_prefetch = 0 : i64, scratch_operands = 0 : i64, tpu.core_type = #tpu.core_type<tc>, window_params = [{transform_indices = @transform_0, window_bounds = array<i64: 6>}, {transform_indices = @transform_1, window_bounds = array<i64: 1, 12, 8, 128>}, {transform_indices = @transform_2, window_bounds = array<i64: 1, 6, 8, 128>}, {transform_indices = @transform_3, window_bounds = array<i64: 1, 4, 8, 128>}]} {
    %c0_i32 = arith.constant 0 : i32
    %0 = arith.cmpi eq, %arg1, %c0_i32 : i32
    %c0_i32_0 = arith.constant 0 : i32
    %1 = arith.cmpi eq, %arg2, %c0_i32_0 : i32
    %2 = arith.andi %0, %1 : i1
    %3 = arith.extui %2 : i1 to i32
    %c0_i32_1 = arith.constant 0 : i32
    %4 = arith.cmpi ne, %3, %c0_i32_1 : i32
    scf.if %4 {
      %cst_181 = arith.constant 0.000000e+00 : f32
      %315 = vector.broadcast %cst_181 : f32 to vector<4x8x128xf32>
      %c0_182 = arith.constant 0 : index
      %c0_183 = arith.constant 0 : index
      %c0_184 = arith.constant 0 : index
      %c0_185 = arith.constant 0 : index
      %316 = vector.load %arg6[%c0_182, %c0_183, %c0_184, %c0_185] : memref<1x4x8x128xf32, #tpu.memory_space<vmem>>, vector<1x4x8x128xf32>
      %317 = vector.shape_cast %316 : vector<1x4x8x128xf32> to vector<4x8x128xf32>
      %318 = vector.shape_cast %315 : vector<4x8x128xf32> to vector<1x4x8x128xf32>
      tpu.vector_store %arg6[%c0_182, %c0_183, %c0_184, %c0_185], %318 {strides = array<i32>} : memref<1x4x8x128xf32, #tpu.memory_space<vmem>>, vector<1x4x8x128xf32>,
    } else {
    }
    %c2_i32 = arith.constant 2 : i32
    %5 = arith.muli %c2_i32, %arg1 : i32
    %6 = arith.index_cast %5 : i32 to index
    %7 = memref.load %arg3[%6] : memref<6xf32, #tpu.memory_space<smem>>
    %c2_i32_2 = arith.constant 2 : i32
    %8 = arith.muli %c2_i32_2, %arg1 : i32
    %c1_i32 = arith.constant 1 : i32
    %9 = arith.addi %8, %c1_i32 : i32
    %10 = arith.index_cast %9 : i32 to index
    %11 = memref.load %arg3[%10] : memref<6xf32, #tpu.memory_space<smem>>
    %c1_i32_3 = arith.constant 1 : i32
    %12 = arith.muli %arg0, %c1_i32_3 : i32
    %13 = arith.addi %12, %arg2 : i32
    %14 = tpu.iota {dimensions = array<i32: 0>} : vector<8x128xi32>
    %15 = tpu.iota {dimensions = array<i32: 1>} : vector<8x128xi32>
    %c8_i32 = arith.constant 8 : i32
    %16 = arith.muli %13, %c8_i32 : i32
    %17 = vector.broadcast %16 : i32 to vector<8x128xi32>
    %18 = arith.addi %17, %14 : vector<8x128xi32>
    %c128_i32 = arith.constant 128 : i32
    %19 = vector.broadcast %c128_i32 : i32 to vector<8x128xi32>
    %20 = arith.muli %18, %19 : vector<8x128xi32>
    %21 = arith.addi %20, %15 : vector<8x128xi32>
    %c128_i32_4 = arith.constant 128 : i32
    %22 = vector.broadcast %c128_i32_4 : i32 to vector<8x128xi32>
    %23 = arith.cmpi slt, %21, %22 : vector<8x128xi32>
    %c0 = arith.constant 0 : index
    %c0_5 = arith.constant 0 : index
    %c0_6 = arith.constant 0 : index
    %c0_7 = arith.constant 0 : index
    %24 = vector.load %arg5[%c0, %c0_5, %c0_6, %c0_7] : memref<1x6x8x128xf32, #tpu.memory_space<vmem>>, vector<1x1x8x128xf32>
    %25 = vector.shape_cast %24 : vector<1x1x8x128xf32> to vector<8x128xf32>
    %cst = arith.constant 1.000000e+00 : f32
    %26 = vector.broadcast %cst : f32 to vector<8x128xf32>
    %27 = arith.cmpf oeq, %25, %26 : vector<8x128xf32>
    %cst_8 = arith.constant 1.000000e+00 : f32
    %cst_9 = arith.constant 0.000000e+00 : f32
    %28 = vector.broadcast %cst_8 : f32 to vector<8x128xf32>
    %29 = vector.broadcast %cst_9 : f32 to vector<8x128xf32>
    %30 = arith.select %27, %28, %29 : vector<8x128xi1>, vector<8x128xf32>
    %cst_10 = arith.constant 0.000000e+00 : f32
    %31 = vector.broadcast %cst_10 : f32 to vector<8x128xf32>
    %32 = arith.cmpf oeq, %25, %31 : vector<8x128xf32>
    %33 = arith.andi %32, %23 : vector<8x128xi1>
    %cst_11 = arith.constant 1.000000e+00 : f32
    %cst_12 = arith.constant 0.000000e+00 : f32
    %34 = vector.broadcast %cst_11 : f32 to vector<8x128xf32>
    %35 = vector.broadcast %cst_12 : f32 to vector<8x128xf32>
    %36 = arith.select %33, %34, %35 : vector<8x128xi1>, vector<8x128xf32>
    %c0_13 = arith.constant 0 : index
    %c0_14 = arith.constant 0 : index
    %c0_15 = arith.constant 0 : index
    %c0_16 = arith.constant 0 : index
    %37 = vector.load %arg4[%c0_13, %c0_14, %c0_15, %c0_16] : memref<1x12x8x128xf32, #tpu.memory_space<vmem>>, vector<1x1x8x128xf32>
    %38 = vector.shape_cast %37 : vector<1x1x8x128xf32> to vector<8x128xf32>
    %39 = math.absf %38 : vector<8x128xf32>
    %cst_17 = arith.constant 0.000000e+00 : f32
    %40 = vector.broadcast %cst_17 : f32 to vector<8x128xf32>
    %41 = arith.subf %40, %39 : vector<8x128xf32>
    %42 = math.exp %41 : vector<8x128xf32>
    %cst_18 = arith.constant 0.000000e+00 : f32
    %43 = vector.broadcast %cst_18 : f32 to vector<8x128xf32>
    %44 = arith.maximumf %38, %43 : vector<8x128xf32>
    %45 = arith.mulf %38, %25 : vector<8x128xf32>
    %46 = arith.subf %44, %45 : vector<8x128xf32>
    %cst_19 = arith.constant 1.000000e+00 : f32
    %47 = vector.broadcast %cst_19 : f32 to vector<8x128xf32>
    %48 = arith.addf %47, %42 : vector<8x128xf32>
    %49 = math.log %48 : vector<8x128xf32>
    %50 = arith.addf %46, %49 : vector<8x128xf32>
    %cst_20 = arith.constant 0.000000e+00 : f32
    %51 = vector.broadcast %cst_20 : f32 to vector<8x128xf32>
    %52 = arith.cmpf oge, %38, %51 : vector<8x128xf32>
    %cst_21 = arith.constant 1.000000e+00 : f32
    %53 = vector.broadcast %cst_21 : f32 to vector<8x128xf32>
    %54 = arith.select %52, %53, %42 : vector<8x128xi1>, vector<8x128xf32>
    %cst_22 = arith.constant 1.000000e+00 : f32
    %55 = vector.broadcast %cst_22 : f32 to vector<8x128xf32>
    %56 = arith.addf %55, %42 : vector<8x128xf32>
    %57 = arith.divf %54, %56 : vector<8x128xf32>
    %c0_23 = arith.constant 0 : index
    %c1 = arith.constant 1 : index
    %c0_24 = arith.constant 0 : index
    %c0_25 = arith.constant 0 : index
    %58 = vector.load %arg4[%c0_23, %c1, %c0_24, %c0_25] : memref<1x12x8x128xf32, #tpu.memory_space<vmem>>, vector<1x1x8x128xf32>
    %59 = vector.shape_cast %58 : vector<1x1x8x128xf32> to vector<8x128xf32>
    %cst_26 = arith.constant 5.000000e-01 : f32
    %60 = vector.broadcast %cst_26 : f32 to vector<8x128xf32>
    %61 = arith.mulf %60, %59 : vector<8x128xf32>
    %62 = math.tanh %61 : vector<8x128xf32>
    %cst_27 = arith.constant 1.000000e+00 : f32
    %63 = vector.broadcast %cst_27 : f32 to vector<8x128xf32>
    %64 = arith.addf %62, %63 : vector<8x128xf32>
    %cst_28 = arith.constant 5.000000e-01 : f32
    %65 = vector.broadcast %cst_28 : f32 to vector<8x128xf32>
    %66 = arith.mulf %65, %64 : vector<8x128xf32>
    %c0_29 = arith.constant 0 : index
    %c2 = arith.constant 2 : index
    %c0_30 = arith.constant 0 : index
    %c0_31 = arith.constant 0 : index
    %67 = vector.load %arg4[%c0_29, %c2, %c0_30, %c0_31] : memref<1x12x8x128xf32, #tpu.memory_space<vmem>>, vector<1x1x8x128xf32>
    %68 = vector.shape_cast %67 : vector<1x1x8x128xf32> to vector<8x128xf32>
    %cst_32 = arith.constant 5.000000e-01 : f32
    %69 = vector.broadcast %cst_32 : f32 to vector<8x128xf32>
    %70 = arith.mulf %69, %68 : vector<8x128xf32>
    %71 = math.tanh %70 : vector<8x128xf32>
    %cst_33 = arith.constant 1.000000e+00 : f32
    %72 = vector.broadcast %cst_33 : f32 to vector<8x128xf32>
    %73 = arith.addf %71, %72 : vector<8x128xf32>
    %cst_34 = arith.constant 5.000000e-01 : f32
    %74 = vector.broadcast %cst_34 : f32 to vector<8x128xf32>
    %75 = arith.mulf %74, %73 : vector<8x128xf32>
    %c0_35 = arith.constant 0 : index
    %c3 = arith.constant 3 : index
    %c0_36 = arith.constant 0 : index
    %c0_37 = arith.constant 0 : index
    %76 = vector.load %arg4[%c0_35, %c3, %c0_36, %c0_37] : memref<1x12x8x128xf32, #tpu.memory_space<vmem>>, vector<1x1x8x128xf32>
    %77 = vector.shape_cast %76 : vector<1x1x8x128xf32> to vector<8x128xf32>
    %c0_38 = arith.constant 0 : index
    %c4 = arith.constant 4 : index
    %c0_39 = arith.constant 0 : index
    %c0_40 = arith.constant 0 : index
    %78 = vector.load %arg4[%c0_38, %c4, %c0_39, %c0_40] : memref<1x12x8x128xf32, #tpu.memory_space<vmem>>, vector<1x1x8x128xf32>
    %79 = vector.shape_cast %78 : vector<1x1x8x128xf32> to vector<8x128xf32>
    %80 = math.exp %77 : vector<8x128xf32>
    %81 = vector.broadcast %7 : f32 to vector<8x128xf32>
    %82 = arith.mulf %80, %81 : vector<8x128xf32>
    %83 = math.exp %79 : vector<8x128xf32>
    %84 = vector.broadcast %11 : f32 to vector<8x128xf32>
    %85 = arith.mulf %83, %84 : vector<8x128xf32>
    %c0_41 = arith.constant 0 : index
    %c1_42 = arith.constant 1 : index
    %c0_43 = arith.constant 0 : index
    %c0_44 = arith.constant 0 : index
    %86 = vector.load %arg5[%c0_41, %c1_42, %c0_43, %c0_44] : memref<1x6x8x128xf32, #tpu.memory_space<vmem>>, vector<1x1x8x128xf32>
    %87 = vector.shape_cast %86 : vector<1x1x8x128xf32> to vector<8x128xf32>
    %c0_45 = arith.constant 0 : index
    %c2_46 = arith.constant 2 : index
    %c0_47 = arith.constant 0 : index
    %c0_48 = arith.constant 0 : index
    %88 = vector.load %arg5[%c0_45, %c2_46, %c0_47, %c0_48] : memref<1x6x8x128xf32, #tpu.memory_space<vmem>>, vector<1x1x8x128xf32>
    %89 = vector.shape_cast %88 : vector<1x1x8x128xf32> to vector<8x128xf32>
    %c0_49 = arith.constant 0 : index
    %c3_50 = arith.constant 3 : index
    %c0_51 = arith.constant 0 : index
    %c0_52 = arith.constant 0 : index
    %90 = vector.load %arg5[%c0_49, %c3_50, %c0_51, %c0_52] : memref<1x6x8x128xf32, #tpu.memory_space<vmem>>, vector<1x1x8x128xf32>
    %91 = vector.shape_cast %90 : vector<1x1x8x128xf32> to vector<8x128xf32>
    %c0_53 = arith.constant 0 : index
    %c4_54 = arith.constant 4 : index
    %c0_55 = arith.constant 0 : index
    %c0_56 = arith.constant 0 : index
    %92 = vector.load %arg5[%c0_53, %c4_54, %c0_55, %c0_56] : memref<1x6x8x128xf32, #tpu.memory_space<vmem>>, vector<1x1x8x128xf32>
    %93 = vector.shape_cast %92 : vector<1x1x8x128xf32> to vector<8x128xf32>
    %cst_57 = arith.constant 5.000000e-01 : f32
    %94 = vector.broadcast %cst_57 : f32 to vector<8x128xf32>
    %95 = arith.mulf %82, %94 : vector<8x128xf32>
    %96 = arith.addf %66, %95 : vector<8x128xf32>
    %cst_58 = arith.constant 5.000000e-01 : f32
    %97 = vector.broadcast %cst_58 : f32 to vector<8x128xf32>
    %98 = arith.mulf %91, %97 : vector<8x128xf32>
    %99 = arith.addf %87, %98 : vector<8x128xf32>
    %100 = arith.minimumf %96, %99 : vector<8x128xf32>
    %cst_59 = arith.constant 5.000000e-01 : f32
    %101 = vector.broadcast %cst_59 : f32 to vector<8x128xf32>
    %102 = arith.mulf %82, %101 : vector<8x128xf32>
    %103 = arith.subf %66, %102 : vector<8x128xf32>
    %cst_60 = arith.constant 5.000000e-01 : f32
    %104 = vector.broadcast %cst_60 : f32 to vector<8x128xf32>
    %105 = arith.mulf %91, %104 : vector<8x128xf32>
    %106 = arith.subf %87, %105 : vector<8x128xf32>
    %107 = arith.maximumf %103, %106 : vector<8x128xf32>
    %108 = arith.subf %100, %107 : vector<8x128xf32>
    %cst_61 = arith.constant 0.000000e+00 : f32
    %109 = vector.broadcast %cst_61 : f32 to vector<8x128xf32>
    %110 = arith.maximumf %108, %109 : vector<8x128xf32>
    %cst_62 = arith.constant 5.000000e-01 : f32
    %111 = vector.broadcast %cst_62 : f32 to vector<8x128xf32>
    %112 = arith.mulf %85, %111 : vector<8x128xf32>
    %113 = arith.addf %75, %112 : vector<8x128xf32>
    %cst_63 = arith.constant 5.000000e-01 : f32
    %114 = vector.broadcast %cst_63 : f32 to vector<8x128xf32>
    %115 = arith.mulf %93, %114 : vector<8x128xf32>
    %116 = arith.addf %89, %115 : vector<8x128xf32>
    %117 = arith.minimumf %113, %116 : vector<8x128xf32>
    %cst_64 = arith.constant 5.000000e-01 : f32
    %118 = vector.broadcast %cst_64 : f32 to vector<8x128xf32>
    %119 = arith.mulf %85, %118 : vector<8x128xf32>
    %120 = arith.subf %75, %119 : vector<8x128xf32>
    %cst_65 = arith.constant 5.000000e-01 : f32
    %121 = vector.broadcast %cst_65 : f32 to vector<8x128xf32>
    %122 = arith.mulf %93, %121 : vector<8x128xf32>
    %123 = arith.subf %89, %122 : vector<8x128xf32>
    %124 = arith.maximumf %120, %123 : vector<8x128xf32>
    %125 = arith.subf %117, %124 : vector<8x128xf32>
    %cst_66 = arith.constant 0.000000e+00 : f32
    %126 = vector.broadcast %cst_66 : f32 to vector<8x128xf32>
    %127 = arith.maximumf %125, %126 : vector<8x128xf32>
    %128 = arith.mulf %110, %127 : vector<8x128xf32>
    %129 = arith.mulf %82, %85 : vector<8x128xf32>
    %130 = math.absf %129 : vector<8x128xf32>
    %131 = arith.mulf %91, %93 : vector<8x128xf32>
    %132 = math.absf %131 : vector<8x128xf32>
    %133 = arith.addf %130, %132 : vector<8x128xf32>
    %134 = arith.subf %133, %128 : vector<8x128xf32>
    %cst_67 = arith.constant 9.99999997E-7 : f32
    %135 = vector.broadcast %cst_67 : f32 to vector<8x128xf32>
    %136 = arith.addf %134, %135 : vector<8x128xf32>
    %137 = arith.divf %128, %136 : vector<8x128xf32>
    %138 = arith.mulf %137, %25 : vector<8x128xf32>
    %139 = arith.subf %57, %138 : vector<8x128xf32>
    %140 = arith.mulf %139, %139 : vector<8x128xf32>
    %cst_68 = arith.constant 1.000000e+00 : f32
    %141 = arith.divf %cst_68, %7 : f32
    %142 = vector.broadcast %141 : f32 to vector<8x128xf32>
    %143 = arith.mulf %91, %142 : vector<8x128xf32>
    %cst_69 = arith.constant 1.000000e-16 : f32
    %144 = vector.broadcast %cst_69 : f32 to vector<8x128xf32>
    %145 = arith.addf %144, %143 : vector<8x128xf32>
    %146 = math.log %145 : vector<8x128xf32>
    %cst_70 = arith.constant 1.000000e+00 : f32
    %147 = arith.divf %cst_70, %11 : f32
    %148 = vector.broadcast %147 : f32 to vector<8x128xf32>
    %149 = arith.mulf %93, %148 : vector<8x128xf32>
    %cst_71 = arith.constant 1.000000e-16 : f32
    %150 = vector.broadcast %cst_71 : f32 to vector<8x128xf32>
    %151 = arith.addf %150, %149 : vector<8x128xf32>
    %152 = math.log %151 : vector<8x128xf32>
    %153 = arith.subf %66, %87 : vector<8x128xf32>
    %154 = arith.mulf %153, %153 : vector<8x128xf32>
    %155 = arith.subf %75, %89 : vector<8x128xf32>
    %156 = arith.mulf %155, %155 : vector<8x128xf32>
    %157 = arith.addf %154, %156 : vector<8x128xf32>
    %158 = arith.subf %77, %146 : vector<8x128xf32>
    %159 = arith.mulf %158, %158 : vector<8x128xf32>
    %160 = arith.addf %157, %159 : vector<8x128xf32>
    %161 = arith.subf %79, %152 : vector<8x128xf32>
    %162 = arith.mulf %161, %161 : vector<8x128xf32>
    %163 = arith.addf %160, %162 : vector<8x128xf32>
    %c0_72 = arith.constant 0 : index
    %c5 = arith.constant 5 : index
    %c0_73 = arith.constant 0 : index
    %c0_74 = arith.constant 0 : index
    %164 = vector.load %arg5[%c0_72, %c5, %c0_73, %c0_74] : memref<1x6x8x128xf32, #tpu.memory_space<vmem>>, vector<1x1x8x128xf32>
    %165 = vector.shape_cast %164 : vector<1x1x8x128xf32> to vector<8x128xf32>
    %166 = arith.fptosi %165 : vector<8x128xf32> to vector<8x128xi32>
    %c0_75 = arith.constant 0 : index
    %c5_76 = arith.constant 5 : index
    %c0_77 = arith.constant 0 : index
    %c0_78 = arith.constant 0 : index
    %167 = vector.load %arg4[%c0_75, %c5_76, %c0_77, %c0_78] : memref<1x12x8x128xf32, #tpu.memory_space<vmem>>, vector<1x1x8x128xf32>
    %168 = vector.shape_cast %167 : vector<1x1x8x128xf32> to vector<8x128xf32>
    %c1_i32_79 = arith.constant 1 : i32
    %c5_i32 = arith.constant 5 : i32
    %169 = arith.addi %c5_i32, %c1_i32_79 : i32
    %c0_80 = arith.constant 0 : index
    %170 = arith.index_cast %169 : i32 to index
    %c0_81 = arith.constant 0 : index
    %c0_82 = arith.constant 0 : index
    %171 = vector.load %arg4[%c0_80, %170, %c0_81, %c0_82] : memref<1x12x8x128xf32, #tpu.memory_space<vmem>>, vector<1x1x8x128xf32>
    %172 = vector.shape_cast %171 : vector<1x1x8x128xf32> to vector<8x128xf32>
    %173 = arith.maximumf %168, %172 : vector<8x128xf32>
    %c2_i32_83 = arith.constant 2 : i32
    %c5_i32_84 = arith.constant 5 : i32
    %174 = arith.addi %c5_i32_84, %c2_i32_83 : i32
    %c0_85 = arith.constant 0 : index
    %175 = arith.index_cast %174 : i32 to index
    %c0_86 = arith.constant 0 : index
    %c0_87 = arith.constant 0 : index
    %176 = vector.load %arg4[%c0_85, %175, %c0_86, %c0_87] : memref<1x12x8x128xf32, #tpu.memory_space<vmem>>, vector<1x1x8x128xf32>
    %177 = vector.shape_cast %176 : vector<1x1x8x128xf32> to vector<8x128xf32>
    %178 = arith.maximumf %173, %177 : vector<8x128xf32>
    %c3_i32 = arith.constant 3 : i32
    %c5_i32_88 = arith.constant 5 : i32
    %179 = arith.addi %c5_i32_88, %c3_i32 : i32
    %c0_89 = arith.constant 0 : index
    %180 = arith.index_cast %179 : i32 to index
    %c0_90 = arith.constant 0 : index
    %c0_91 = arith.constant 0 : index
    %181 = vector.load %arg4[%c0_89, %180, %c0_90, %c0_91] : memref<1x12x8x128xf32, #tpu.memory_space<vmem>>, vector<1x1x8x128xf32>
    %182 = vector.shape_cast %181 : vector<1x1x8x128xf32> to vector<8x128xf32>
    %183 = arith.maximumf %178, %182 : vector<8x128xf32>
    %c4_i32 = arith.constant 4 : i32
    %c5_i32_92 = arith.constant 5 : i32
    %184 = arith.addi %c5_i32_92, %c4_i32 : i32
    %c0_93 = arith.constant 0 : index
    %185 = arith.index_cast %184 : i32 to index
    %c0_94 = arith.constant 0 : index
    %c0_95 = arith.constant 0 : index
    %186 = vector.load %arg4[%c0_93, %185, %c0_94, %c0_95] : memref<1x12x8x128xf32, #tpu.memory_space<vmem>>, vector<1x1x8x128xf32>
    %187 = vector.shape_cast %186 : vector<1x1x8x128xf32> to vector<8x128xf32>
    %188 = arith.maximumf %183, %187 : vector<8x128xf32>
    %c5_i32_96 = arith.constant 5 : i32
    %c5_i32_97 = arith.constant 5 : i32
    %189 = arith.addi %c5_i32_97, %c5_i32_96 : i32
    %c0_98 = arith.constant 0 : index
    %190 = arith.index_cast %189 : i32 to index
    %c0_99 = arith.constant 0 : index
    %c0_100 = arith.constant 0 : index
    %191 = vector.load %arg4[%c0_98, %190, %c0_99, %c0_100] : memref<1x12x8x128xf32, #tpu.memory_space<vmem>>, vector<1x1x8x128xf32>
    %192 = vector.shape_cast %191 : vector<1x1x8x128xf32> to vector<8x128xf32>
    %193 = arith.maximumf %188, %192 : vector<8x128xf32>
    %c6_i32 = arith.constant 6 : i32
    %c5_i32_101 = arith.constant 5 : i32
    %194 = arith.addi %c5_i32_101, %c6_i32 : i32
    %c0_102 = arith.constant 0 : index
    %195 = arith.index_cast %194 : i32 to index
    %c0_103 = arith.constant 0 : index
    %c0_104 = arith.constant 0 : index
    %196 = vector.load %arg4[%c0_102, %195, %c0_103, %c0_104] : memref<1x12x8x128xf32, #tpu.memory_space<vmem>>, vector<1x1x8x128xf32>
    %197 = vector.shape_cast %196 : vector<1x1x8x128xf32> to vector<8x128xf32>
    %198 = arith.maximumf %193, %197 : vector<8x128xf32>
    %c6_i32_105 = arith.constant 6 : i32
    %cst_106 = arith.constant 0.000000e+00 : f32
    %199 = vector.broadcast %cst_106 : f32 to vector<8x128xf32>
    %c0_i32_107 = arith.constant 0 : i32
    %c5_i32_108 = arith.constant 5 : i32
    %200 = arith.addi %c5_i32_108, %c0_i32_107 : i32
    %c0_109 = arith.constant 0 : index
    %201 = arith.index_cast %200 : i32 to index
    %c0_110 = arith.constant 0 : index
    %c0_111 = arith.constant 0 : index
    %202 = vector.load %arg4[%c0_109, %201, %c0_110, %c0_111] : memref<1x12x8x128xf32, #tpu.memory_space<vmem>>, vector<1x1x8x128xf32>
    %203 = vector.shape_cast %202 : vector<1x1x8x128xf32> to vector<8x128xf32>
    %204 = arith.subf %203, %198 : vector<8x128xf32>
    %205 = math.exp %204 : vector<8x128xf32>
    %206 = arith.addf %199, %205 : vector<8x128xf32>
    %207 = vector.broadcast %c0_i32_107 : i32 to vector<8x128xi32>
    %208 = arith.cmpi eq, %166, %207 : vector<8x128xi32>
    %cst_112 = arith.constant 0.000000e+00 : f32
    %209 = vector.broadcast %cst_112 : f32 to vector<8x128xf32>
    %210 = arith.select %208, %203, %209 : vector<8x128xi1>, vector<8x128xf32>
    %211 = arith.addf %199, %210 : vector<8x128xf32>
    %c1_i32_113 = arith.constant 1 : i32
    %c5_i32_114 = arith.constant 5 : i32
    %212 = arith.addi %c5_i32_114, %c1_i32_113 : i32
    %c0_115 = arith.constant 0 : index
    %213 = arith.index_cast %212 : i32 to index
    %c0_116 = arith.constant 0 : index
    %c0_117 = arith.constant 0 : index
    %214 = vector.load %arg4[%c0_115, %213, %c0_116, %c0_117] : memref<1x12x8x128xf32, #tpu.memory_space<vmem>>, vector<1x1x8x128xf32>
    %215 = vector.shape_cast %214 : vector<1x1x8x128xf32> to vector<8x128xf32>
    %216 = arith.subf %215, %198 : vector<8x128xf32>
    %217 = math.exp %216 : vector<8x128xf32>
    %218 = arith.addf %206, %217 : vector<8x128xf32>
    %219 = vector.broadcast %c1_i32_113 : i32 to vector<8x128xi32>
    %220 = arith.cmpi eq, %166, %219 : vector<8x128xi32>
    %cst_118 = arith.constant 0.000000e+00 : f32
    %221 = vector.broadcast %cst_118 : f32 to vector<8x128xf32>
    %222 = arith.select %220, %215, %221 : vector<8x128xi1>, vector<8x128xf32>
    %223 = arith.addf %211, %222 : vector<8x128xf32>
    %c2_i32_119 = arith.constant 2 : i32
    %c5_i32_120 = arith.constant 5 : i32
    %224 = arith.addi %c5_i32_120, %c2_i32_119 : i32
    %c0_121 = arith.constant 0 : index
    %225 = arith.index_cast %224 : i32 to index
    %c0_122 = arith.constant 0 : index
    %c0_123 = arith.constant 0 : index
    %226 = vector.load %arg4[%c0_121, %225, %c0_122, %c0_123] : memref<1x12x8x128xf32, #tpu.memory_space<vmem>>, vector<1x1x8x128xf32>
    %227 = vector.shape_cast %226 : vector<1x1x8x128xf32> to vector<8x128xf32>
    %228 = arith.subf %227, %198 : vector<8x128xf32>
    %229 = math.exp %228 : vector<8x128xf32>
    %230 = arith.addf %218, %229 : vector<8x128xf32>
    %231 = vector.broadcast %c2_i32_119 : i32 to vector<8x128xi32>
    %232 = arith.cmpi eq, %166, %231 : vector<8x128xi32>
    %cst_124 = arith.constant 0.000000e+00 : f32
    %233 = vector.broadcast %cst_124 : f32 to vector<8x128xf32>
    %234 = arith.select %232, %227, %233 : vector<8x128xi1>, vector<8x128xf32>
    %235 = arith.addf %223, %234 : vector<8x128xf32>
    %c3_i32_125 = arith.constant 3 : i32
    %c5_i32_126 = arith.constant 5 : i32
    %236 = arith.addi %c5_i32_126, %c3_i32_125 : i32
    %c0_127 = arith.constant 0 : index
    %237 = arith.index_cast %236 : i32 to index
    %c0_128 = arith.constant 0 : index
    %c0_129 = arith.constant 0 : index
    %238 = vector.load %arg4[%c0_127, %237, %c0_128, %c0_129] : memref<1x12x8x128xf32, #tpu.memory_space<vmem>>, vector<1x1x8x128xf32>
    %239 = vector.shape_cast %238 : vector<1x1x8x128xf32> to vector<8x128xf32>
    %240 = arith.subf %239, %198 : vector<8x128xf32>
    %241 = math.exp %240 : vector<8x128xf32>
    %242 = arith.addf %230, %241 : vector<8x128xf32>
    %243 = vector.broadcast %c3_i32_125 : i32 to vector<8x128xi32>
    %244 = arith.cmpi eq, %166, %243 : vector<8x128xi32>
    %cst_130 = arith.constant 0.000000e+00 : f32
    %245 = vector.broadcast %cst_130 : f32 to vector<8x128xf32>
    %246 = arith.select %244, %239, %245 : vector<8x128xi1>, vector<8x128xf32>
    %247 = arith.addf %235, %246 : vector<8x128xf32>
    %c4_i32_131 = arith.constant 4 : i32
    %c5_i32_132 = arith.constant 5 : i32
    %248 = arith.addi %c5_i32_132, %c4_i32_131 : i32
    %c0_133 = arith.constant 0 : index
    %249 = arith.index_cast %248 : i32 to index
    %c0_134 = arith.constant 0 : index
    %c0_135 = arith.constant 0 : index
    %250 = vector.load %arg4[%c0_133, %249, %c0_134, %c0_135] : memref<1x12x8x128xf32, #tpu.memory_space<vmem>>, vector<1x1x8x128xf32>
    %251 = vector.shape_cast %250 : vector<1x1x8x128xf32> to vector<8x128xf32>
    %252 = arith.subf %251, %198 : vector<8x128xf32>
    %253 = math.exp %252 : vector<8x128xf32>
    %254 = arith.addf %242, %253 : vector<8x128xf32>
    %255 = vector.broadcast %c4_i32_131 : i32 to vector<8x128xi32>
    %256 = arith.cmpi eq, %166, %255 : vector<8x128xi32>
    %cst_136 = arith.constant 0.000000e+00 : f32
    %257 = vector.broadcast %cst_136 : f32 to vector<8x128xf32>
    %258 = arith.select %256, %251, %257 : vector<8x128xi1>, vector<8x128xf32>
    %259 = arith.addf %247, %258 : vector<8x128xf32>
    %c5_i32_137 = arith.constant 5 : i32
    %c5_i32_138 = arith.constant 5 : i32
    %260 = arith.addi %c5_i32_138, %c5_i32_137 : i32
    %c0_139 = arith.constant 0 : index
    %261 = arith.index_cast %260 : i32 to index
    %c0_140 = arith.constant 0 : index
    %c0_141 = arith.constant 0 : index
    %262 = vector.load %arg4[%c0_139, %261, %c0_140, %c0_141] : memref<1x12x8x128xf32, #tpu.memory_space<vmem>>, vector<1x1x8x128xf32>
    %263 = vector.shape_cast %262 : vector<1x1x8x128xf32> to vector<8x128xf32>
    %264 = arith.subf %263, %198 : vector<8x128xf32>
    %265 = math.exp %264 : vector<8x128xf32>
    %266 = arith.addf %254, %265 : vector<8x128xf32>
    %267 = vector.broadcast %c5_i32_137 : i32 to vector<8x128xi32>
    %268 = arith.cmpi eq, %166, %267 : vector<8x128xi32>
    %cst_142 = arith.constant 0.000000e+00 : f32
    %269 = vector.broadcast %cst_142 : f32 to vector<8x128xf32>
    %270 = arith.select %268, %263, %269 : vector<8x128xi1>, vector<8x128xf32>
    %271 = arith.addf %259, %270 : vector<8x128xf32>
    %c6_i32_143 = arith.constant 6 : i32
    %c5_i32_144 = arith.constant 5 : i32
    %272 = arith.addi %c5_i32_144, %c6_i32_143 : i32
    %c0_145 = arith.constant 0 : index
    %273 = arith.index_cast %272 : i32 to index
    %c0_146 = arith.constant 0 : index
    %c0_147 = arith.constant 0 : index
    %274 = vector.load %arg4[%c0_145, %273, %c0_146, %c0_147] : memref<1x12x8x128xf32, #tpu.memory_space<vmem>>, vector<1x1x8x128xf32>
    %275 = vector.shape_cast %274 : vector<1x1x8x128xf32> to vector<8x128xf32>
    %276 = arith.subf %275, %198 : vector<8x128xf32>
    %277 = math.exp %276 : vector<8x128xf32>
    %278 = arith.addf %266, %277 : vector<8x128xf32>
    %279 = vector.broadcast %c6_i32_143 : i32 to vector<8x128xi32>
    %280 = arith.cmpi eq, %166, %279 : vector<8x128xi32>
    %cst_148 = arith.constant 0.000000e+00 : f32
    %281 = vector.broadcast %cst_148 : f32 to vector<8x128xf32>
    %282 = arith.select %280, %275, %281 : vector<8x128xi1>, vector<8x128xf32>
    %283 = arith.addf %271, %282 : vector<8x128xf32>
    %c7_i32 = arith.constant 7 : i32
    %284 = math.log %278 : vector<8x128xf32>
    %285 = arith.addf %198, %284 : vector<8x128xf32>
    %286 = arith.subf %285, %283 : vector<8x128xf32>
    %c0_149 = arith.constant 0 : index
    %c0_150 = arith.constant 0 : index
    %c0_151 = arith.constant 0 : index
    %c0_152 = arith.constant 0 : index
    %287 = vector.load %arg6[%c0_149, %c0_150, %c0_151, %c0_152] : memref<1x4x8x128xf32, #tpu.memory_space<vmem>>, vector<1x1x8x128xf32>
    %288 = vector.shape_cast %287 : vector<1x1x8x128xf32> to vector<8x128xf32>
    %289 = arith.mulf %50, %36 : vector<8x128xf32>
    %290 = arith.addf %288, %289 : vector<8x128xf32>
    %c0_153 = arith.constant 0 : index
    %c0_154 = arith.constant 0 : index
    %c0_155 = arith.constant 0 : index
    %c0_156 = arith.constant 0 : index
    %291 = vector.load %arg6[%c0_153, %c0_154, %c0_155, %c0_156] : memref<1x4x8x128xf32, #tpu.memory_space<vmem>>, vector<1x1x8x128xf32>
    %292 = vector.shape_cast %291 : vector<1x1x8x128xf32> to vector<8x128xf32>
    %293 = vector.shape_cast %290 : vector<8x128xf32> to vector<1x1x8x128xf32>
    tpu.vector_store %arg6[%c0_153, %c0_154, %c0_155, %c0_156], %293 {strides = array<i32>} : memref<1x4x8x128xf32, #tpu.memory_space<vmem>>, vector<1x1x8x128xf32>,
    %c0_157 = arith.constant 0 : index
    %c1_158 = arith.constant 1 : index
    %c0_159 = arith.constant 0 : index
    %c0_160 = arith.constant 0 : index
    %294 = vector.load %arg6[%c0_157, %c1_158, %c0_159, %c0_160] : memref<1x4x8x128xf32, #tpu.memory_space<vmem>>, vector<1x1x8x128xf32>
    %295 = vector.shape_cast %294 : vector<1x1x8x128xf32> to vector<8x128xf32>
    %296 = arith.mulf %140, %30 : vector<8x128xf32>
    %297 = arith.addf %295, %296 : vector<8x128xf32>
    %c0_161 = arith.constant 0 : index
    %c1_162 = arith.constant 1 : index
    %c0_163 = arith.constant 0 : index
    %c0_164 = arith.constant 0 : index
    %298 = vector.load %arg6[%c0_161, %c1_162, %c0_163, %c0_164] : memref<1x4x8x128xf32, #tpu.memory_space<vmem>>, vector<1x1x8x128xf32>
    %299 = vector.shape_cast %298 : vector<1x1x8x128xf32> to vector<8x128xf32>
    %300 = vector.shape_cast %297 : vector<8x128xf32> to vector<1x1x8x128xf32>
    tpu.vector_store %arg6[%c0_161, %c1_162, %c0_163, %c0_164], %300 {strides = array<i32>} : memref<1x4x8x128xf32, #tpu.memory_space<vmem>>, vector<1x1x8x128xf32>,
    %c0_165 = arith.constant 0 : index
    %c2_166 = arith.constant 2 : index
    %c0_167 = arith.constant 0 : index
    %c0_168 = arith.constant 0 : index
    %301 = vector.load %arg6[%c0_165, %c2_166, %c0_167, %c0_168] : memref<1x4x8x128xf32, #tpu.memory_space<vmem>>, vector<1x1x8x128xf32>
    %302 = vector.shape_cast %301 : vector<1x1x8x128xf32> to vector<8x128xf32>
    %303 = arith.mulf %163, %30 : vector<8x128xf32>
    %304 = arith.addf %302, %303 : vector<8x128xf32>
    %c0_169 = arith.constant 0 : index
    %c2_170 = arith.constant 2 : index
    %c0_171 = arith.constant 0 : index
    %c0_172 = arith.constant 0 : index
    %305 = vector.load %arg6[%c0_169, %c2_170, %c0_171, %c0_172] : memref<1x4x8x128xf32, #tpu.memory_space<vmem>>, vector<1x1x8x128xf32>
    %306 = vector.shape_cast %305 : vector<1x1x8x128xf32> to vector<8x128xf32>
    %307 = vector.shape_cast %304 : vector<8x128xf32> to vector<1x1x8x128xf32>
    tpu.vector_store %arg6[%c0_169, %c2_170, %c0_171, %c0_172], %307 {strides = array<i32>} : memref<1x4x8x128xf32, #tpu.memory_space<vmem>>, vector<1x1x8x128xf32>,
    %c0_173 = arith.constant 0 : index
    %c3_174 = arith.constant 3 : index
    %c0_175 = arith.constant 0 : index
    %c0_176 = arith.constant 0 : index
    %308 = vector.load %arg6[%c0_173, %c3_174, %c0_175, %c0_176] : memref<1x4x8x128xf32, #tpu.memory_space<vmem>>, vector<1x1x8x128xf32>
    %309 = vector.shape_cast %308 : vector<1x1x8x128xf32> to vector<8x128xf32>
    %310 = arith.mulf %286, %30 : vector<8x128xf32>
    %311 = arith.addf %309, %310 : vector<8x128xf32>
    %c0_177 = arith.constant 0 : index
    %c3_178 = arith.constant 3 : index
    %c0_179 = arith.constant 0 : index
    %c0_180 = arith.constant 0 : index
    %312 = vector.load %arg6[%c0_177, %c3_178, %c0_179, %c0_180] : memref<1x4x8x128xf32, #tpu.memory_space<vmem>>, vector<1x1x8x128xf32>
    %313 = vector.shape_cast %312 : vector<1x1x8x128xf32> to vector<8x128xf32>
    %314 = vector.shape_cast %311 : vector<8x128xf32> to vector<1x1x8x128xf32>
    tpu.vector_store %arg6[%c0_177, %c3_178, %c0_179, %c0_180], %314 {strides = array<i32>} : memref<1x4x8x128xf32, #tpu.memory_space<vmem>>, vector<1x1x8x128xf32>,
    return
  }
  func.func @transform_0(%arg0: i32, %arg1: i32, %arg2: i32) -> i32 {
    %c0_i32 = arith.constant 0 : i32
    %c0_i32_0 = arith.constant 0 : i32
    return %c0_i32 : i32
  }
  func.func @transform_1(%arg0: i32, %arg1: i32, %arg2: i32) -> (i32, i32, i32, i32) {
    %c1_i32 = arith.constant 1 : i32
    %0 = arith.muli %arg0, %c1_i32 : i32
    %1 = arith.addi %0, %arg2 : i32
    %c0_i32 = arith.constant 0 : i32
    %c0_i32_0 = arith.constant 0 : i32
    %c0_i32_1 = arith.constant 0 : i32
    return %arg1, %c0_i32, %1, %c0_i32_0 : i32, i32, i32, i32
  }
  func.func @transform_2(%arg0: i32, %arg1: i32, %arg2: i32) -> (i32, i32, i32, i32) {
    %c1_i32 = arith.constant 1 : i32
    %0 = arith.muli %arg0, %c1_i32 : i32
    %1 = arith.addi %0, %arg2 : i32
    %c0_i32 = arith.constant 0 : i32
    %c0_i32_0 = arith.constant 0 : i32
    %c0_i32_1 = arith.constant 0 : i32
    return %arg1, %c0_i32, %1, %c0_i32_0 : i32, i32, i32, i32
  }
  func.func @transform_3(%arg0: i32, %arg1: i32, %arg2: i32) -> (i32, i32, i32, i32) {
    %c0_i32 = arith.constant 0 : i32
    %c0_i32_0 = arith.constant 0 : i32
    %c0_i32_1 = arith.constant 0 : i32
    %c0_i32_2 = arith.constant 0 : i32
    return %arg0, %c0_i32, %c0_i32_0, %c0_i32_1 : i32, i32, i32, i32
  }
}

</mosaic_0001>

<llo_original>
// kernel: yolo_loss.1
$region0: #{yolo_loss.1}
  #allocation0 [shape = 'u32[]', space=smem, size = 0x4, offset = 0x4, fixed_abs, tag = 'smem constant byte address 0x4 - core index']
  #allocation1 [shape = 'u32[144,128]{1,0:T(1,128)}', space=vmem, size = 0x12000, scoped, tag = 'internal scratch']
  %s0 = inlined_call_operand.vmem [shape: f32[6], index: 0, kind: input, shape index: {}]
  %s1 = inlined_call_operand.vmem [shape: f32[3,12,8,128], index: 1, kind: input, shape index: {}]
  %s2 = inlined_call_operand.vmem [shape: f32[3,6,8,128], index: 2, kind: input, shape index: {}]
  %s3 = inlined_call_operand.vmem [shape: f32[1,4,8,128], index: 3, kind: output, shape index: {}]
  %s4 = sld [smem:[#allocation0]]
  $region53: #{yolo_loss.1} parent=0
    _
  %s6 = ssub.s32 1, %s4
  %s7 = scalar_select 0, %s6, %s4
  $region1: #{yolo_loss.1} parent=0
    #allocation2 [shape = 'u8[512]{0}', space=smem, size = 0x200, scoped, tag = 'input window, operand 0, single buffered']
    #allocation3 [shape = 's32[2]{0}', space=sflag, size = 0x8, scoped, tag = 'scoped memory for yolo_loss.1']
    %8 = vsyncpa [#allocation3], 0
    loop: start=0, step=1, limit=5
    $region2: #{yolo_loss.1} parent=1 // loop_pre_header
      _
    $region3: #{yolo_loss.1} parent=1 // loop_header
      %s10 = sphi 0, %s14
      %p11 = scmp.ge.s32.totalorder %s10, 5
      %s17 = sphi 0, %s36
      %s18 = sphi 0, %s32
      %s19 = sphi 0, %s28
      %s20 = sphi 0, %s17
      %s21 = sphi 0, %s18
      %s22 = sphi 0, %s19
      %s23 = sphi 0, %s20
      %s24 = sphi 0, %s21
      %s25 = sphi 0, %s22
      %s37 = sphi 0, %s37
      %s39 = sphi 0, %s37
      %s40 = sphi 0, %s39
      %s54 = sphi 0, %s40
      %s64 = sphi 0, %s66
      %s67 = sphi 0, %s64
      %s68 = sphi 0, %s67
      %s84 = sphi 0, %s68
      %s94 = sphi 0, %s96
      %s97 = sphi 0, %s94
      %s98 = sphi 0, %s97
      %s114 = sphi 0, %s98
      %s120 = sphi 0, %s122
      %s123 = sphi 0, %s120
      %s124 = sphi 0, %s123
      %s140 = sphi 0, %s124
    $region4: #{yolo_loss.1} parent=1 // loop_header_branch
      %13 = sbr.rel (%p11) target = $region8
    $region5: #{yolo_loss.1} parent=1 // loop_body
      %s15 = ssub.s32 %s10, 1
      %s16 = ssub.s32 %s10, 2
      %s26 = sadd.s32 1, %s19
      %p27 = scmp.ge.s32.totalorder %s26, 1
      %s28 = scalar_select %p27, 0, %s26
      %s29 = sadd.s32 1, %s18
      %s30 = scalar_select %p27, %s29, %s18
      %p31 = scmp.ge.s32.totalorder %s30, 3
      %s32 = scalar_select %p31, 0, %s30
      %s33 = sadd.s32 1, %s17
      %s34 = scalar_select %p31, %s33, %s17
      %p35 = scmp.ge.s32.totalorder %s34, 1
      %s36 = scalar_select %p35, 0, %s34
      %s38 = sadd.s32 %s37, 1
      %p41 = scmp.eq.s32.totalorder %s10, 2
      %p42 = scmp.ne.s32.totalorder %s37, %s39
      %p43 = scmp.eq.s32.totalorder %s10, 0
      %p44 = por %p42, %p43
      %p45 = scmp.ne.s32.totalorder %s37, %s39
      %p46 = scmp.eq.s32.totalorder %s15, 2
      %p47 = por %p45, %p46
      %p48 = scmp.ne.s32.totalorder %s39, %s40
      %p49 = scmp.eq.s32.totalorder %s15, 0
      %p50 = por %p48, %p49
      %p51 = scmp.ne.s32.totalorder %s39, %s40
      %p52 = scmp.eq.s32.totalorder %s16, 2
      %p53 = por %p51, %p52
      %p55 = scmp.ne.s32.totalorder %s40, %s54
      %p56 = scmp.eq.s32.totalorder %s16, 0
      %p57 = por %p55, %p56
      %s58 = sadd.s32 %s17, %s19
      %s59 = sadd.s32 %s36, %s28
      %s60 = ssub.s32 %s18, %s32
      %s61 = ssub.s32 %s58, %s59
      %s62 = sor.u32 %s60, %s61
      %p63 = scmp.eq.s32.totalorder %s62, 0
      %s65 = sadd.s32 %s64, 1
      %s66 = scalar_select %p63, %s64, %s65
      %p69 = pneg %p63
      %p70 = scmp.eq.s32.totalorder %s10, 2
      %p71 = por %p69, %p70
      %p72 = scmp.ne.s32.totalorder %s64, %s67
      %p73 = scmp.eq.s32.totalorder %s10, 0
      %p74 = por %p72, %p73
      %p75 = scmp.ne.s32.totalorder %s64, %s67
      %p76 = scmp.eq.s32.totalorder %s15, 2
      %p77 = por %p75, %p76
      %p78 = scmp.ne.s32.totalorder %s67, %s68
      %p79 = scmp.eq.s32.totalorder %s15, 0
      %p80 = por %p78, %p79
      %p81 = scmp.ne.s32.totalorder %s67, %s68
      %p82 = scmp.eq.s32.totalorder %s16, 2
      %p83 = por %p81, %p82
      %p85 = scmp.ne.s32.totalorder %s68, %s84
      %p86 = scmp.eq.s32.totalorder %s16, 0
      %p87 = por %p85, %p86
      %s88 = sadd.s32 %s17, %s19
      %s89 = sadd.s32 %s36, %s28
      %s90 = ssub.s32 %s18, %s32
      %s91 = ssub.s32 %s88, %s89
      %s92 = sor.u32 %s90, %s91
      %p93 = scmp.eq.s32.totalorder %s92, 0
      %s95 = sadd.s32 %s94, 1
      %s96 = scalar_select %p93, %s94, %s95
      %p99 = pneg %p93
      %p100 = scmp.eq.s32.totalorder %s10, 2
      %p101 = por %p99, %p100
      %p102 = scmp.ne.s32.totalorder %s94, %s97
      %p103 = scmp.eq.s32.totalorder %s10, 0
      %p104 = por %p102, %p103
      %p105 = scmp.ne.s32.totalorder %s94, %s97
      %p106 = scmp.eq.s32.totalorder %s15, 2
      %p107 = por %p105, %p106
      %p108 = scmp.ne.s32.totalorder %s97, %s98
      %p109 = scmp.eq.s32.totalorder %s15, 0
      %p110 = por %p108, %p109
      %p111 = scmp.ne.s32.totalorder %s97, %s98
      %p112 = scmp.eq.s32.totalorder %s16, 2
      %p113 = por %p111, %p112
      %p115 = scmp.ne.s32.totalorder %s98, %s114
      %p116 = scmp.eq.s32.totalorder %s16, 0
      %p117 = por %p115, %p116
      %s118 = ssub.s32 %s17, %s36
      %p119 = scmp.eq.s32.totalorder %s118, 0
      %s121 = sadd.s32 %s120, 1
      %s122 = scalar_select %p119, %s120, %s121
      %p125 = pneg %p119
      %p126 = scmp.eq.s32.totalorder %s10, 2
      %p127 = por %p125, %p126
      %p128 = scmp.ne.s32.totalorder %s120, %s123
      %p129 = scmp.eq.s32.totalorder %s10, 0
      %p130 = por %p128, %p129
      %p131 = scmp.ne.s32.totalorder %s120, %s123
      %p132 = scmp.eq.s32.totalorder %s15, 2
      %p133 = por %p131, %p132
      %p134 = scmp.ne.s32.totalorder %s123, %s124
      %p135 = scmp.eq.s32.totalorder %s15, 0
      %p136 = por %p134, %p135
      %p137 = scmp.ne.s32.totalorder %s123, %s124
      %p138 = scmp.eq.s32.totalorder %s16, 2
      %p139 = por %p137, %p138
      %p141 = scmp.ne.s32.totalorder %s124, %s140
      %p142 = scmp.eq.s32.totalorder %s16, 0
      %p143 = por %p141, %p142
      %p144 = scmp.le.s32.totalorder 1, %s10
      %p145 = scmp.lt.s32.totalorder %s10, 4
      %p146 = pnand %p144, %p145
      %p147 = pneg %p146
      // Predicated region
      $region9: #{yolo_loss.1} parent=5 // pred_check
        _
      $region10: #{yolo_loss.1} parent=5 // pred_check_branch
        %149 = sbr.rel (%p146) target = $region12
      $region11: #{yolo_loss.1} parent=5 // pred_region
        %s150 = ssub.s32 %s10, 1
        // Predicated region
        $region13: #{yolo_loss.1} parent=11 // pred_check
          %p151 = pneg %p50
        $region14: #{yolo_loss.1} parent=11 // pred_check_branch
          %153 = sbr.rel (%p151) target = $region16
        $region15: #{yolo_loss.1} parent=11 // pred_region
          %s155 = ssub.s32 16, 16
          %156 = vsyncadd [#allocation3], %s155
          %s158 = sshll.u32 %s0, 4
          %s159 = int_to_ptr.vmem [resolvable:$true] %s158
          %161 = dma.vmem_to_smem %s159, 16, [#allocation2], [#allocation3]
        $region16: #{yolo_loss.1} parent=11 // pred_fallthru
          _
      $region12: #{yolo_loss.1} parent=5 // pred_fallthru
        _
      %p162 = scmp.lt.s32.totalorder %s10, 3
      // Predicated region
      $region17: #{yolo_loss.1} parent=5 // pred_check
        %p163 = pneg %p162
      $region18: #{yolo_loss.1} parent=5 // pred_check_branch
        %165 = sbr.rel (%p163) target = $region20
      $region19: #{yolo_loss.1} parent=5 // pred_region
        // Predicated region
        $region21: #{yolo_loss.1} parent=19 // pred_check
          %p166 = pneg %p74
        $region22: #{yolo_loss.1} parent=19 // pred_check_branch
          %168 = sbr.rel (%p166) target = $region24
        $region23: #{yolo_loss.1} parent=19 // pred_region
          %s169 = sadd.s32 %s17, %s19
          %p170 = scmp.lt.s32.totalorder %s18, 2
          %s171 = scalar_select %p170, %s18, 2
          %p172 = scmp.lt.s32.totalorder %s169, 0
          %s173 = scalar_select %p172, %s169, 0
          %s174 = smul.addr %s171, 12
          %s175 = sadd.s32 %s173, %s174
          %s176 = smul.addr %s175, 8
          %s177 = scalar_lea.vmem %s1, %s176
          %s178 = sadd.s32 %s17, %s19
        $region24: #{yolo_loss.1} parent=19 // pred_fallthru
          _
        // Predicated region
        $region25: #{yolo_loss.1} parent=19 // pred_check
          %p179 = pneg %p104
        $region26: #{yolo_loss.1} parent=19 // pred_check_branch
          %181 = sbr.rel (%p179) target = $region28
        $region27: #{yolo_loss.1} parent=19 // pred_region
          %s182 = sadd.s32 %s17, %s19
          %p183 = scmp.lt.s32.totalorder %s18, 2
          %s184 = scalar_select %p183, %s18, 2
          %p185 = scmp.lt.s32.totalorder %s182, 0
          %s186 = scalar_select %p185, %s182, 0
          %s187 = smul.addr %s184, 6
          %s188 = sadd.s32 %s186, %s187
          %s189 = smul.addr %s188, 8
          %s190 = scalar_lea.vmem %s2, %s189
          %s191 = sadd.s32 %s17, %s19
        $region28: #{yolo_loss.1} parent=19 // pred_fallthru
          _
      $region20: #{yolo_loss.1} parent=5 // pred_fallthru
        _
      %p192 = scmp.le.s32.totalorder 1, %s10
      %p193 = scmp.lt.s32.totalorder %s10, 4
      %p194 = pnand %p192, %p193
      %p195 = pneg %p194
      // Predicated region
      $region29: #{yolo_loss.1} parent=5 // pred_check
        _
      $region30: #{yolo_loss.1} parent=5 // pred_check_branch
        %197 = sbr.rel (%p194) target = $region32
      $region31: #{yolo_loss.1} parent=5 // pred_region
        %s198 = ssub.s32 %s10, 1
        // Predicated region
        $region33: #{yolo_loss.1} parent=31 // pred_check
          %p199 = pneg %p50
        $region34: #{yolo_loss.1} parent=31 // pred_check_branch
          %201 = sbr.rel (%p199) target = $region36
        $region35: #{yolo_loss.1} parent=31 // pred_region
          %202 = dma.done [#allocation3], 16
        $region36: #{yolo_loss.1} parent=31 // pred_fallthru
          _
        %203 = sfence
        %p204 = pneg %p50
        %p205 = pneg %p47
        %s206 = sadd.s32 %s20, %s22
        %p207 = scmp.lt.s32.totalorder %s21, 2
        %s208 = scalar_select %p207, %s21, 2
        %p209 = scmp.lt.s32.totalorder %s206, 0
        %s210 = scalar_select %p209, %s206, 0
        %s211 = smul.addr %s208, 12
        %s212 = sadd.s32 %s210, %s211
        %s213 = smul.addr %s212, 8
        %s214 = scalar_lea.vmem %s1, %s213
        %p215 = pneg %p80
        %p216 = pneg %p77
        %s217 = sadd.s32 %s20, %s22
        %p218 = scmp.lt.s32.totalorder %s21, 2
        %s219 = scalar_select %p218, %s21, 2
        %p220 = scmp.lt.s32.totalorder %s217, 0
        %s221 = scalar_select %p220, %s217, 0
        %s222 = smul.addr %s219, 6
        %s223 = sadd.s32 %s221, %s222
        %s224 = smul.addr %s223, 8
        %s225 = scalar_lea.vmem %s2, %s224
        %p226 = pneg %p110
        %p227 = pneg %p107
        %p228 = pneg %p136
        %p229 = pneg %p133
        %p230 = scmp.lt.s32.totalorder %s20, 0
        %s231 = scalar_select %p230, %s20, 0
        %s232 = smul.addr %s231, 4
        %s233 = smul.addr %s232, 8
        %s234 = scalar_lea.vmem %s3, %s233
        %s235 = sadd.s32 %s20, %s22
        %p236 = scmp.lt.s32.totalorder %s21, 2
        %s237 = scalar_select %p236, %s21, 2
        %p238 = scmp.lt.s32.totalorder %s235, 0
        %s239 = scalar_select %p238, %s235, 0
        %s240 = smul.addr %s237, 12
        %s241 = sadd.s32 %s239, %s240
        %s242 = smul.addr %s241, 8
        %s243 = scalar_lea.vmem %s1, %s242
        %s244 = sadd.s32 %s20, %s22
        %s245 = sadd.s32 %s20, %s22
        %p246 = scmp.lt.s32.totalorder %s21, 2
        %s247 = scalar_select %p246, %s21, 2
        %p248 = scmp.lt.s32.totalorder %s245, 0
        %s249 = scalar_select %p248, %s245, 0
        %s250 = smul.addr %s247, 6
        %s251 = sadd.s32 %s249, %s250
        %s252 = smul.addr %s251, 8
        %s253 = scalar_lea.vmem %s2, %s252
        %s254 = sadd.s32 %s20, %s22
        %p255 = scmp.lt.s32.totalorder %s20, 0
        %s256 = scalar_select %p255, %s20, 0
        %s257 = smul.addr %s256, 4
        %s258 = smul.addr %s257, 8
        %s259 = scalar_lea.vmem %s3, %s258
        %p260 = scmp.eq.s32.totalorder %s21, 0
        %p261 = scmp.eq.s32.totalorder %s22, 0
        %p262 = pnand %p260, %p261
        %p263 = pneg %p262
        // Predicated region
        $region37: #{yolo_loss.1} parent=31 // pred_check
          _
        $region38: #{yolo_loss.1} parent=31 // pred_check_branch
          %265 = sbr.rel (%p262) target = $region40
        $region39: #{yolo_loss.1} parent=31 // pred_region
          %266 = vst [vmem:[%s259] sm:$0xff] 0.0
          %267 = vst [vmem:[%s259 + $0x8] sm:$0xff] 0.0
          %268 = vst [vmem:[%s259 + $0x10] sm:$0xff] 0.0
          %269 = vst [vmem:[%s259 + $0x18] sm:$0xff] 0.0
        $region40: #{yolo_loss.1} parent=31 // pred_fallthru
          _
        %s270 = smul.u32 %s21, 2
        %s271 = sld [smem:[#allocation2 + %s270]]
        %s272 = sadd.s32 %s270, 1
        %s273 = sld [smem:[#allocation2 + %s272]]
        %s274 = sadd.s32 %s20, %s22
        %v275 = vlaneseq
        %v276 = vshrl.u32 %v275, 7
        %v277 = vlaneseq
        %v278 = vand.u32 %v277, 127
        %s279 = smul.u32 %s274, 8
        %v280 = vstv %s279
        %v281 = vadd.s32 %v280, %v276
        %v282 = vmul.u32 %v281, 128
        %v283 = vadd.s32 %v282, %v278
        %vm284 = vcmp.lt.s32.totalorder %v283, 128
        %v285 = vld [vmem:[%s253] sm:$0xff]
        %vm286 = vcmp.eq.f32.partialorder %v285, 1.0
        %v287 = vsel %vm286, 1.0, 0.0
        %vm288 = vcmp.eq.f32.partialorder %v285, 0.0
        %vm289 = vmand %vm288, %vm284
        %v290 = vsel %vm289, 1.0, 0.0
        %v291 = vld [vmem:[%s243] sm:$0xff]
        %v292 = vand.u32 2147483647, %v291
        %v293 = vsub.f32 0.0, %v292
        %v294 = vmul.f32 %v293, 1.442695
        %v295 = vpow.pop %v294
        %v296 = vmax.f32 %v291, 0.0
        %v297 = vmul.f32 %v291, %v285
        %v298 = vsub.f32 %v296, %v297
        %v299 = vadd.f32 %v295, 1.0
        %v300 = vlog2.pop %v299
        %v301 = vmul.f32 %v300, 0.6931472
        %v302 = vadd.f32 %v298, %v301
        %vm303 = vcmp.ge.f32.partialorder %v291, 0.0
        %v304 = vsel %vm303, 1.0, %v295
        %v305 = vrcp.pop %v299
        %v306 = vmul.f32 %v304, %v305
        %s307 = scalar_lea.vmem %s243, 8
        %v308 = vld [vmem:[%s307] sm:$0xff]
        %v309 = vmul.f32 %v308, 0.5
        %v310 = vtanh.pop %v309
        %v311 = vadd.f32 %v310, 1.0
        %v312 = vmul.f32 %v311, 0.5
        %s313 = scalar_lea.vmem %s243, 16
        %v314 = vld [vmem:[%s313] sm:$0xff]
        %v315 = vmul.f32 %v314, 0.5
        %v316 = vtanh.pop %v315
        %v317 = vadd.f32 %v316, 1.0
        %v318 = vmul.f32 %v317, 0.5
        %s319 = scalar_lea.vmem %s243, 24
        %v320 = vld [vmem:[%s319] sm:$0xff]
        %s321 = scalar_lea.vmem %s243, 32
        %v322 = vld [vmem:[%s321] sm:$0xff]
        %v323 = vmul.f32 %v320, 1.442695
        %v324 = vpow.pop %v323
        %v325 = vstv %s271
        %v326 = vmul.f32 %v324, %v325
        %v327 = vmul.f32 %v322, 1.442695
        %v328 = vpow.pop %v327
        %v329 = vstv %s273
        %v330 = vmul.f32 %v328, %v329
        %s331 = scalar_lea.vmem %s253, 8
        %v332 = vld [vmem:[%s331] sm:$0xff]
        %s333 = scalar_lea.vmem %s253, 16
        %v334 = vld [vmem:[%s333] sm:$0xff]
        %s335 = scalar_lea.vmem %s253, 24
        %v336 = vld [vmem:[%s335] sm:$0xff]
        %s337 = scalar_lea.vmem %s253, 32
        %v338 = vld [vmem:[%s337] sm:$0xff]
        %v339 = vmul.f32 %v326, 0.5
        %v340 = vadd.f32 %v312, %v339
        %v341 = vmul.f32 %v336, 0.5
        %v342 = vadd.f32 %v332, %v341
        %v343 = vmin.f32 %v340, %v342
        %v344 = vsub.f32 %v312, %v339
        %v345 = vsub.f32 %v332, %v341
        %v346 = vmax.f32 %v344, %v345
        %v347 = vsub.f32 %v343, %v346
        %v348 = vmax.f32 %v347, 0.0
        %v349 = vmul.f32 %v330, 0.5
        %v350 = vadd.f32 %v318, %v349
        %v351 = vmul.f32 %v338, 0.5
        %v352 = vadd.f32 %v334, %v351
        %v353 = vmin.f32 %v350, %v352
        %v354 = vsub.f32 %v318, %v349
        %v355 = vsub.f32 %v334, %v351
        %v356 = vmax.f32 %v354, %v355
        %v357 = vsub.f32 %v353, %v356
        %v358 = vmax.f32 %v357, 0.0
        %v359 = vmul.f32 %v348, %v358
        %v360 = vmul.f32 %v326, %v330
        %v361 = vand.u32 2147483647, %v360
        %v362 = vmul.f32 %v336, %v338
        %v363 = vand.u32 2147483647, %v362
        %v364 = vadd.f32 %v361, %v363
        %v365 = vsub.f32 %v364, %v359
        %v366 = vadd.f32 %v365, 1e-06
        %v367 = vrcp.pop %v366
        %v368 = vmul.f32 %v359, %v367
        %v369 = vmul.f32 %v368, %v285
        %v370 = vsub.f32 %v306, %v369
        %v371 = vmul.f32 %v370, %v370
        %v372 = vstv %s271
        %v373 = vrcp.pop %v372
        %s374 = vtos %v373
        %v375 = vstv %s374
        %v376 = vmul.f32 %v336, %v375
        %v377 = vadd.f32 %v376, 1e-16
        %v378 = vlog2.pop %v377
        %v379 = vmul.f32 %v378, 0.6931472
        %v380 = vstv %s273
        %v381 = vrcp.pop %v380
        %s382 = vtos %v381
        %v383 = vstv %s382
        %v384 = vmul.f32 %v338, %v383
        %v385 = vadd.f32 %v384, 1e-16
        %v386 = vlog2.pop %v385
        %v387 = vmul.f32 %v386, 0.6931472
        %v388 = vsub.f32 %v312, %v332
        %v389 = vmul.f32 %v388, %v388
        %v390 = vsub.f32 %v318, %v334
        %v391 = vmul.f32 %v390, %v390
        %v392 = vadd.f32 %v389, %v391
        %v393 = vsub.f32 %v320, %v379
        %v394 = vmul.f32 %v393, %v393
        %v395 = vadd.f32 %v392, %v394
        %v396 = vsub.f32 %v322, %v387
        %v397 = vmul.f32 %v396, %v396
        %v398 = vadd.f32 %v395, %v397
        %s399 = scalar_lea.vmem %s253, 40
        %v400 = vld [vmem:[%s399] sm:$0xff]
        %v401 = vcvt.f32.s32.to.zero.pseudo %v400
        %s402 = scalar_lea.vmem %s243, 40
        %v403 = vld [vmem:[%s402] sm:$0xff]
        %s404 = scalar_lea.vmem %s243, 48
        %v405 = vld [vmem:[%s404] sm:$0xff]
        %v406 = vmax.f32 %v403, %v405
        %s407 = scalar_lea.vmem %s243, 56
        %v408 = vld [vmem:[%s407] sm:$0xff]
        %v409 = vmax.f32 %v406, %v408
        %s410 = scalar_lea.vmem %s243, 64
        %v411 = vld [vmem:[%s410] sm:$0xff]
        %v412 = vmax.f32 %v409, %v411
        %s413 = scalar_lea.vmem %s243, 72
        %v414 = vld [vmem:[%s413] sm:$0xff]
        %v415 = vmax.f32 %v412, %v414
        %s416 = scalar_lea.vmem %s243, 80
        %v417 = vld [vmem:[%s416] sm:$0xff]
        %v418 = vmax.f32 %v415, %v417
        %s419 = scalar_lea.vmem %s243, 88
        %v420 = vld [vmem:[%s419] sm:$0xff]
        %v421 = vmax.f32 %v418, %v420
        %v422 = vsub.f32 %v403, %v421
        %v423 = vmul.f32 %v422, 1.442695
        %v424 = vpow.pop %v423
        %v425 = vadd.f32 %v424, 0.0
        %vm426 = vcmp.eq.s32.totalorder %v401, 0
        %v427 = vsel %vm426, %v403, 0.0
        %v428 = vadd.f32 %v427, 0.0
        %v429 = vsub.f32 %v405, %v421
        %v430 = vmul.f32 %v429, 1.442695
        %v431 = vpow.pop %v430
        %v432 = vadd.f32 %v425, %v431
        %vm433 = vcmp.eq.s32.totalorder %v401, 1
        %v434 = vsel %vm433, %v405, 0.0
        %v435 = vadd.f32 %v428, %v434
        %v436 = vsub.f32 %v408, %v421
        %v437 = vmul.f32 %v436, 1.442695
        %v438 = vpow.pop %v437
        %v439 = vadd.f32 %v432, %v438
        %vm440 = vcmp.eq.s32.totalorder %v401, 2
        %v441 = vsel %vm440, %v408, 0.0
        %v442 = vadd.f32 %v435, %v441
        %v443 = vsub.f32 %v411, %v421
        %v444 = vmul.f32 %v443, 1.442695
        %v445 = vpow.pop %v444
        %v446 = vadd.f32 %v439, %v445
        %vm447 = vcmp.eq.s32.totalorder %v401, 3
        %v448 = vsel %vm447, %v411, 0.0
        %v449 = vadd.f32 %v442, %v448
        %v450 = vsub.f32 %v414, %v421
        %v451 = vmul.f32 %v450, 1.442695
        %v452 = vpow.pop %v451
        %v453 = vadd.f32 %v446, %v452
        %vm454 = vcmp.eq.s32.totalorder %v401, 4
        %v455 = vsel %vm454, %v414, 0.0
        %v456 = vadd.f32 %v449, %v455
        %v457 = vsub.f32 %v417, %v421
        %v458 = vmul.f32 %v457, 1.442695
        %v459 = vpow.pop %v458
        %v460 = vadd.f32 %v453, %v459
        %vm461 = vcmp.eq.s32.totalorder %v401, 5
        %v462 = vsel %vm461, %v417, 0.0
        %v463 = vadd.f32 %v456, %v462
        %v464 = vsub.f32 %v420, %v421
        %v465 = vmul.f32 %v464, 1.442695
        %v466 = vpow.pop %v465
        %v467 = vadd.f32 %v460, %v466
        %vm468 = vcmp.eq.s32.totalorder %v401, 6
        %v469 = vsel %vm468, %v420, 0.0
        %v470 = vadd.f32 %v463, %v469
        %v471 = vlog2.pop %v467
        %v472 = vmul.f32 %v471, 0.6931472
        %v473 = vadd.f32 %v421, %v472
        %v474 = vsub.f32 %v473, %v470
        %v475 = vld [vmem:[%s259] sm:$0xff]
        %v476 = vmul.f32 %v302, %v290
        %v477 = vadd.f32 %v475, %v476
        %478 = vst [vmem:[%s259] sm:$0xff] %v477
        %s479 = scalar_lea.vmem %s259, 8
        %v480 = vld [vmem:[%s479] sm:$0xff]
        %v481 = vmul.f32 %v371, %v287
        %v482 = vadd.f32 %v480, %v481
        %483 = vst [vmem:[%s479] sm:$0xff] %v482
        %s484 = scalar_lea.vmem %s259, 16
        %v485 = vld [vmem:[%s484] sm:$0xff]
        %v486 = vmul.f32 %v398, %v287
        %v487 = vadd.f32 %v485, %v486
        %488 = vst [vmem:[%s484] sm:$0xff] %v487
        %s489 = scalar_lea.vmem %s259, 24
        %v490 = vld [vmem:[%s489] sm:$0xff]
        %v491 = vmul.f32 %v474, %v287
        %v492 = vadd.f32 %v490, %v491
        %493 = vst [vmem:[%s489] sm:$0xff] %v492
        %p494 = scmp.lt.s32.totalorder %s20, 0
        %s495 = scalar_select %p494, %s20, 0
        %s496 = smul.addr %s495, 4
        %s497 = smul.addr %s496, 8
        %s498 = scalar_lea.vmem %s3, %s497
        // Predicated region
        $region41: #{yolo_loss.1} parent=31 // pred_check
          %p499 = pneg %p133
        $region42: #{yolo_loss.1} parent=31 // pred_check_branch
          %501 = sbr.rel (%p499) target = $region44
        $region43: #{yolo_loss.1} parent=31 // pred_region
          _
        $region44: #{yolo_loss.1} parent=31 // pred_fallthru
          _
        // Predicated region
        $region45: #{yolo_loss.1} parent=31 // pred_check
          %p502 = pneg %p133
        $region46: #{yolo_loss.1} parent=31 // pred_check_branch
          %504 = sbr.rel (%p502) target = $region48
        $region47: #{yolo_loss.1} parent=31 // pred_region
          %p505 = scmp.lt.s32.totalorder %s20, 0
          %s506 = scalar_select %p505, %s20, 0
          %s507 = smul.addr %s506, 4
          %s508 = smul.addr %s507, 8
          %s509 = scalar_lea.vmem %s3, %s508
        $region48: #{yolo_loss.1} parent=31 // pred_fallthru
          _
      $region32: #{yolo_loss.1} parent=5 // pred_fallthru
        _
      %p510 = scmp.le.s32.totalorder 2, %s10
      // Predicated region
      $region49: #{yolo_loss.1} parent=5 // pred_check
        %p511 = pneg %p510
      $region50: #{yolo_loss.1} parent=5 // pred_check_branch
        %513 = sbr.rel (%p511) target = $region52
      $region51: #{yolo_loss.1} parent=5 // pred_region
        %s514 = ssub.s32 %s10, 2
      $region52: #{yolo_loss.1} parent=5 // pred_fallthru
        _
    $region6: #{yolo_loss.1} parent=1 // loop_footer
      %s14 = sadd.s32 1, %s10
    $region7: #{yolo_loss.1} parent=1 // loop_footer_branch
      %9 = sbr.rel target = $region3
    $region8: #{yolo_loss.1} parent=1 // loop_exit
      _
    %515 = vsyncpa [#allocation3], 1
    %s516 = scalar_lea.sflag [#allocation3], 1
    %517 = vsyncpa %s516, 1

</llo_original>
